<compile_context>
chip_gen: v7x
topology: tpu7x:2x2x1
jax: 0.10.0
libtpu: 0.0.40
codegen_flags: <defaults>
</compile_context>

<pallas_src>
import functools

import jax
import jax.numpy as jnp
from jax.experimental import pallas as pl
from jax.experimental.pallas import tpu as pltpu


def _round_up(x, m):
    return (x + m - 1) // m * m


def _gcn_kernel(a_ref, xw_ref, b_ref, o_ref, *scratch, tk, xw_resident):
    # a_ref  : (tm, tk)           A tile (bf16/f32)
    # xw_ref : (Nk, F_pad) if xw_resident else (tk, F_pad)   XW = X @ W.T
    # b_ref  : (1, F_pad)  f32 bias (padded)
    # o_ref  : (tm, F_pad) output tile (resident across k: index_map ignores k)
    # scratch: optional (tm, F_pad) f32 accumulator (only for non-f32 outputs)
    k = pl.program_id(1)
    acc_ref = scratch[0] if scratch else o_ref

    @pl.when(k == 0)
    def _():
        # Initialize the resident accumulator with the broadcast bias, so the
        # f32 path needs no separate finalize pass over the tile.
        acc_ref[...] = jnp.zeros_like(acc_ref) + b_ref[...]

    if xw_resident:
        # XW lives fully in VMEM (DMA'd once); slice the current k chunk.
        off = pl.multiple_of(k * tk, tk)
        xw = xw_ref[pl.ds(off, tk), :]
    else:
        xw = xw_ref[...]

    acc_ref[...] += jnp.dot(a_ref[...], xw, preferred_element_type=jnp.float32)

    if scratch:
        @pl.when(k == pl.num_programs(1) - 1)
        def _():
            o_ref[...] = acc_ref[...].astype(o_ref.dtype)


def gcn_layer(A, X, W, b, *, tm_max=512, tk_max=2048, use_bf16=True,
              vmem_limit_bytes=100 << 20):
    """out = (A @ X) @ W.T + b   (matches torch: fc(torch.spmm(A, X))).

    A may be passed pre-cast to bf16 (and pre-padded); the wrapper then skips
    the pad/cast pass, so the cast cost can be amortized across GCN layers.
    """
    N = A.shape[0]
    F_in = X.shape[1]
    F_out = W.shape[0]
    assert A.shape[1] == N and X.shape[0] == N
    assert W.shape[1] == F_in and b.shape == (F_out,)

    # Tile-invariant small matmul done once up front (reassociation).
    # TODO(synk): for genuinely sparse A, a gather/segment-sum formulation (and
    # int8 on v6e / fp8 on v7x for the A stream) would cut traffic further.
    XW = jnp.dot(X, W.T, preferred_element_type=jnp.float32)        # [N, F_out]

    compute_dtype = jnp.bfloat16 if use_bf16 else X.dtype
    bytes_cd = jnp.dtype(compute_dtype).itemsize
    sub = 16 if bytes_cd == 2 else 8          # sublane packing multiple

    out_dtype = X.dtype
    out_is_f32 = jnp.dtype(out_dtype) == jnp.dtype(jnp.float32)

    # Lane-dense output: pad feature dim to a multiple of 128.
    F_pad = _round_up(F_out, 128)

    # Per-generation VMEM clamp (v7x has only 64 MiB per TensorCore).
    try:
        cap = int(pltpu.get_tpu_info().vmem_capacity_bytes)
    except Exception:
        cap = 64 << 20
    vmem_limit = int(min(vmem_limit_bytes, max(cap - (4 << 20), 32 << 20)))

    # Tile sizes.
    tm = min(tm_max, _round_up(N, sub))
    # Prefer >= 2 node tiles so the parallel axis can split across v7x's 2 TCs.
    if N > sub:
        tm = min(tm, _round_up((N + 1) // 2, sub))
    tk = min(tk_max, _round_up(N, 128))

    # Shrink tiles / drop XW residency until the double-buffered working set
    # fits comfortably inside the scoped-VMEM budget.
    while True:
        Nm = _round_up(N, tm)
        Nk = _round_up(N, tk)
        xw_resident = 2 * Nk * F_pad * bytes_cd <= vmem_limit // 4
        est = (3 * tm * tk * bytes_cd                                 # A tiles
               + 2 * (Nk if xw_resident else tk) * F_pad * bytes_cd   # XW
               + 2 * tm * F_pad * 4                                   # out tile
               + (0 if out_is_f32 else tm * F_pad * 4))               # acc
        if est <= (vmem_limit * 3) // 4:
            break
        if tk > 128:
            tk //= 2
        elif tm > sub:
            tm = max(sub, _round_up(tm // 2, sub))
        else:
            break

    # Zero-padded / cast operands; skipped when already in the right form
    # (zero rows/cols contribute nothing to the accumulation).
    def _prep(arr, shape, dtype):
        if tuple(arr.shape) == tuple(shape) and arr.dtype == jnp.dtype(dtype):
            return arr
        buf = jnp.zeros(shape, dtype)
        return buf.at[tuple(slice(0, s) for s in arr.shape)].set(
            arr.astype(dtype))

    A_p = _prep(A, (Nm, Nk), compute_dtype)
    XW_p = _prep(XW, (Nk, F_pad), compute_dtype)
    b_p = _prep(b.reshape(1, F_out), (1, F_pad), jnp.float32)

    n_steps = (Nm // tm) * (Nk // tk)
    if n_steps >= 4:
        # Deeper pipelining on the DMA-bound A stream.
        a_spec = pl.BlockSpec((tm, tk), lambda i, k: (i, k),
                              pipeline_mode=pl.Buffered(3))
    else:
        a_spec = pl.BlockSpec((tm, tk), lambda i, k: (i, k))

    if xw_resident:
        # Constant block index => XW is DMA'd into VMEM exactly once.
        xw_spec = pl.BlockSpec((Nk, F_pad), lambda i, k: (0, 0))
    else:
        xw_spec = pl.BlockSpec((tk, F_pad), lambda i, k: (k, 0))

    scratch_shapes = ([] if out_is_f32
                      else [pltpu.VMEM((tm, F_pad), jnp.float32)])

    kernel = functools.partial(_gcn_kernel, tk=tk, xw_resident=xw_resident)

    out_padded = pl.pallas_call(
        kernel,
        out_shape=jax.ShapeDtypeStruct((Nm, F_pad), out_dtype),
        grid_spec=pltpu.PrefetchScalarGridSpec(
            num_scalar_prefetch=0,
            grid=(Nm // tm, Nk // tk),            # (node tiles, k tiles)
            in_specs=[a_spec, xw_spec,
                      pl.BlockSpec((1, F_pad), lambda i, k: (0, 0))],
            out_specs=pl.BlockSpec((tm, F_pad), lambda i, k: (i, 0)),
            scratch_shapes=scratch_shapes,
        ),
        compiler_params=pltpu.CompilerParams(
            dimension_semantics=("parallel", "arbitrary"),
            vmem_limit_bytes=vmem_limit),
    )(A_p, XW_p, b_p)

    if Nm == N and F_pad == F_out:
        return out_padded
    return out_padded[:N, :F_out]


if __name__ == "__main__":
    # Small shapes consistent with the module's forward:
    #   N nodes = 16, in_features = 32, out_features = 8
    N, F_in, F_out = 16, 32, 8
    key = jax.random.PRNGKey(0)
    k_a, k_x, k_w, k_b = jax.random.split(key, 4)

    # Dense (synthetic) adjacency — spmm with a dense A is just a matmul.
    A = jax.random.uniform(k_a, (N, N), dtype=jnp.float32)
    X = jax.random.normal(k_x, (N, F_in), dtype=jnp.float32)

    # Deterministic Linear(in_features, out_features) parameters
    # (PyTorch default init: uniform(-1/sqrt(F_in), 1/sqrt(F_in))).
    bound = 1.0 / (F_in ** 0.5)
    W = jax.random.uniform(k_w, (F_out, F_in), minval=-bound, maxval=bound,
                           dtype=jnp.float32)
    b = jax.random.uniform(k_b, (F_out,), minval=-bound, maxval=bound,
                           dtype=jnp.float32)

    out = gcn_layer(A, X, W, b)
    jax.block_until_ready(out)

    # Pure-JAX f32 reference check (kernel uses bf16 inputs, f32 accumulation).
    ref = (A @ X) @ W.T + b
    assert out.shape == (N, F_out)
    assert jnp.allclose(out, ref, atol=5e-2, rtol=5e-2), (
        float(jnp.max(jnp.abs(out - ref))))

    print("KERNEL_OK")
</pallas_src>

<mosaic_0001>
module attributes {stable_mosaic.version = 11 : i64} {
  func.func @_gcn_kernel(%arg0: i32, %arg1: i32, %arg2: memref<16x128xbf16, #tpu.memory_space<vmem>>, %arg3: memref<128x128xbf16, #tpu.memory_space<vmem>>, %arg4: memref<1x128xf32, #tpu.memory_space<vmem>>, %arg5: memref<16x128xf32, #tpu.memory_space<vmem>>) attributes {dimension_semantics = [#tpu.dimension_semantics<parallel>, #tpu.dimension_semantics<arbitrary>], iteration_bounds = array<i64: 1, 1>, scalar_prefetch = 0 : i64, scratch_operands = 0 : i64, tpu.core_type = #tpu.core_type<tc>, window_params = [{transform_indices = @transform_0, window_bounds = array<i64: 16, 128>}, {pipeline_mode = #tpu.pipeline_mode<synchronous>, transform_indices = @transform_1, window_bounds = array<i64: 128, 128>}, {pipeline_mode = #tpu.pipeline_mode<synchronous>, transform_indices = @transform_2, window_bounds = array<i64: 1, 128>}, {transform_indices = @transform_3, window_bounds = array<i64: 16, 128>}]} {
    %c0_i32 = arith.constant 0 : i32
    %0 = arith.cmpi eq, %arg1, %c0_i32 : i32
    %1 = arith.extui %0 : i1 to i32
    %c0_i32_0 = arith.constant 0 : i32
    %2 = arith.cmpi ne, %1, %c0_i32_0 : i32
    scf.if %2 {
      %cst_7 = arith.constant 0.000000e+00 : f32
      %12 = vector.broadcast %cst_7 : f32 to vector<16x128xf32>
      %c0_8 = arith.constant 0 : index
      %c0_9 = arith.constant 0 : index
      %13 = vector.load %arg4[%c0_8, %c0_9] : memref<1x128xf32, #tpu.memory_space<vmem>>, vector<1x128xf32>
      %14 = vector.broadcast %13 : vector<1x128xf32> to vector<16x128xf32>
      %15 = arith.addf %12, %14 : vector<16x128xf32>
      %c0_10 = arith.constant 0 : index
      %c0_11 = arith.constant 0 : index
      %16 = vector.load %arg5[%c0_10, %c0_11] : memref<16x128xf32, #tpu.memory_space<vmem>>, vector<16x128xf32>
      tpu.vector_store %arg5[%c0_10, %c0_11], %15 {strides = array<i32>} : memref<16x128xf32, #tpu.memory_space<vmem>>, vector<16x128xf32>,
    } else {
    }
    %c128_i32 = arith.constant 128 : i32
    %3 = arith.muli %arg1, %c128_i32 : i32
    %4 = tpu.assume_multiple %3, 128 : i32
    %5 = arith.index_cast %4 : i32 to index
    %c0 = arith.constant 0 : index
    %6 = vector.load %arg3[%5, %c0] : memref<128x128xbf16, #tpu.memory_space<vmem>>, vector<128x128xbf16>
    %c0_1 = arith.constant 0 : index
    %c0_2 = arith.constant 0 : index
    %7 = vector.load %arg5[%c0_1, %c0_2] : memref<16x128xf32, #tpu.memory_space<vmem>>, vector<16x128xf32>
    %c0_3 = arith.constant 0 : index
    %c0_4 = arith.constant 0 : index
    %8 = vector.load %arg2[%c0_3, %c0_4] : memref<16x128xbf16, #tpu.memory_space<vmem>>, vector<16x128xbf16>
    %cst = arith.constant dense<0.000000e+00> : vector<16x128xf32>
    %9 = tpu.matmul %8, %6, %cst {dimension_numbers = #tpu.dot_dimension_numbers<[1], [0], [0], [1], [0, 0, 1, 1], [], []>} : vector<16x128xbf16>, vector<128x128xbf16>, vector<16x128xf32> -> vector<16x128xf32>
    %10 = arith.addf %7, %9 : vector<16x128xf32>
    %c0_5 = arith.constant 0 : index
    %c0_6 = arith.constant 0 : index
    %11 = vector.load %arg5[%c0_5, %c0_6] : memref<16x128xf32, #tpu.memory_space<vmem>>, vector<16x128xf32>
    tpu.vector_store %arg5[%c0_5, %c0_6], %10 {strides = array<i32>} : memref<16x128xf32, #tpu.memory_space<vmem>>, vector<16x128xf32>,
    return
  }
  func.func @transform_0(%arg0: i32, %arg1: i32) -> (i32, i32) {
    %c0_i32 = arith.constant 0 : i32
    return %arg0, %arg1 : i32, i32
  }
  func.func @transform_1(%arg0: i32, %arg1: i32) -> (i32, i32) {
    %c0_i32 = arith.constant 0 : i32
    %c0_i32_0 = arith.constant 0 : i32
    %c0_i32_1 = arith.constant 0 : i32
    return %c0_i32, %c0_i32_0 : i32, i32
  }
  func.func @transform_2(%arg0: i32, %arg1: i32) -> (i32, i32) {
    %c0_i32 = arith.constant 0 : i32
    %c0_i32_0 = arith.constant 0 : i32
    %c0_i32_1 = arith.constant 0 : i32
    return %c0_i32, %c0_i32_0 : i32, i32
  }
  func.func @transform_3(%arg0: i32, %arg1: i32) -> (i32, i32) {
    %c0_i32 = arith.constant 0 : i32
    %c0_i32_0 = arith.constant 0 : i32
    return %arg0, %c0_i32 : i32, i32
  }
}

</mosaic_0001>

<llo_original>
// kernel: tpu_custom_call.1
$region0: #{tpu_custom_call.1}
  #allocation0 [shape = 'u32[]', space=smem, size = 0x4, offset = 0x4, fixed_abs, tag = 'smem constant byte address 0x4 - core index']
  #allocation1 [shape = 'u32[144,128]{1,0:T(1,128)}', space=vmem, size = 0x12000, scoped, tag = 'internal scratch']
  %s0 = inlined_call_operand.hbm [shape: bf16[16,128], index: 0, kind: input, shape index: {}]
  %s1 = inlined_call_operand.hbm [shape: bf16[128,128], index: 1, kind: input, shape index: {}]
  %s2 = inlined_call_operand.vmem [shape: f32[1,128], index: 2, kind: input, shape index: {}]
  %s3 = inlined_call_operand.hbm [shape: f32[16,128], index: 3, kind: output, shape index: {}]
  %s4 = sld [smem:[#allocation0]]
  $region34: #{tpu_custom_call.1} parent=0
    _
  %s6 = ssub.s32 1, %s4
  %s7 = scalar_select 0, %s6, %s4
  $region1: #{tpu_custom_call.1} parent=0
    #allocation2 [shape = 'u8[4096]{0}', space=vmem, size = 0x1000, scoped, tag = 'input window, operand 0, single buffered']
    #allocation3 [shape = 's32[1]{0}', space=sflag, size = 0x4, scoped, tag = 'scoped memory for tpu_custom_call.1']
    #allocation4 [shape = 's32[1]{0}', space=sflag, size = 0x4, scoped, tag = 'scoped memory for tpu_custom_call.1']
    #allocation5 [shape = 'u8[32768]{0}', space=vmem, size = 0x8000, scoped, tag = 'input window, operand 1, single buffered']
    #allocation6 [shape = 's32[1]{0}', space=sflag, size = 0x4, scoped, tag = 'scoped memory for tpu_custom_call.1']
    #allocation7 [shape = 'u8[8192]{0}', space=vmem, size = 0x2000, scoped, tag = 'output window, operand 0, single buffered']
    %8 = vsyncpa [#allocation3], 0
    %9 = vsyncpa [#allocation6], 0
    %10 = vsyncpa [#allocation4], 0
    // Predicated region
    $region2: #{tpu_custom_call.1} parent=1 // pred_check
      _
    $region3: #{tpu_custom_call.1} parent=1 // pred_check_branch
      %12 = sbr.rel (0) target = $region5
    $region4: #{tpu_custom_call.1} parent=1 // pred_region
      %s14 = ssub.s32 128, 128
      %15 = vsyncadd [#allocation3], %s14
      %s16 = sshll.u32 [#allocation2], 4
      %s17 = int_to_ptr.vmem [resolvable:$true] %s16
      %22 = dma.hbm_to_vmem [thread:$0]  %s0, 128, %s17, [#allocation3], 64, 64, 4
    $region5: #{tpu_custom_call.1} parent=1 // pred_fallthru
      _
    // Predicated region
    $region6: #{tpu_custom_call.1} parent=1 // pred_check
      _
    $region7: #{tpu_custom_call.1} parent=1 // pred_check_branch
      %24 = sbr.rel (0) target = $region9
    $region8: #{tpu_custom_call.1} parent=1 // pred_region
      %s26 = ssub.s32 1024, 1024
      %27 = vsyncadd [#allocation6], %s26
      %s28 = sshll.u32 [#allocation5], 4
      %s29 = int_to_ptr.vmem [resolvable:$true] %s28
      %34 = dma.hbm_to_vmem [thread:$0]  %s1, 1024, %s29, [#allocation6], 64, 64, 4
    $region9: #{tpu_custom_call.1} parent=1 // pred_fallthru
      _
    // Predicated region
    $region10: #{tpu_custom_call.1} parent=1 // pred_check
      _
    $region11: #{tpu_custom_call.1} parent=1 // pred_check_branch
      %36 = sbr.rel (0) target = $region13
    $region12: #{tpu_custom_call.1} parent=1 // pred_region
      _
    $region13: #{tpu_custom_call.1} parent=1 // pred_fallthru
      _
    // Predicated region
    $region14: #{tpu_custom_call.1} parent=1 // pred_check
      _
    $region15: #{tpu_custom_call.1} parent=1 // pred_check_branch
      %38 = sbr.rel (0) target = $region17
    $region16: #{tpu_custom_call.1} parent=1 // pred_region
      %39 = dma.done [#allocation3], 128
    $region17: #{tpu_custom_call.1} parent=1 // pred_fallthru
      _
    // Predicated region
    $region18: #{tpu_custom_call.1} parent=1 // pred_check
      _
    $region19: #{tpu_custom_call.1} parent=1 // pred_check_branch
      %41 = sbr.rel (0) target = $region21
    $region20: #{tpu_custom_call.1} parent=1 // pred_region
      %42 = dma.done [#allocation6], 1024
    $region21: #{tpu_custom_call.1} parent=1 // pred_fallthru
      _
    %p44 = scmp.eq.s32.totalorder 0, 0
    // Predicated region
    $region22: #{tpu_custom_call.1} parent=1 // pred_check
      %p45 = pneg %p44
    $region23: #{tpu_custom_call.1} parent=1 // pred_check_branch
      %47 = sbr.rel (%p45) target = $region25
    $region24: #{tpu_custom_call.1} parent=1 // pred_region
      %v48 = vld [vmem:[%s2] sm:$0x1]
      %v50 = vlaneseq
      %v51 = vshrl.u32 %v50, 7
      %v52 = vsub.s32 0, %v51
      %v53 = vrot.slane %v48, %v52
      %v55 = vadd.f32 %v53, 0.0
      %56 = vst [vmem:[#allocation7] sm:$0xff] %v55
      %57 = vst [vmem:[#allocation7 + $0x8] sm:$0xff] %v55
    $region25: #{tpu_custom_call.1} parent=1 // pred_fallthru
      _
    %s58 = smul.u32 0, 128
    %s59 = sshra.s32 %s58, 3
    %s60 = sand.u32 %s58, 7
    %s61 = smul.addr %s59, 4
    %s62 = scalar_lea.vmem [#allocation5], %s61
    %v63 = vld [vmem:[%s62] sm:$0xf]
    %v64 = vld [vmem:[%s62 + $0x4] sm:$0xf]
    %v65 = vld [vmem:[%s62 + $0x8] sm:$0xf]
    %v66 = vld [vmem:[%s62 + $0xc] sm:$0xf]
    %v67 = vld [vmem:[%s62 + $0x10] sm:$0xf]
    %v68 = vld [vmem:[%s62 + $0x14] sm:$0xf]
    %v69 = vld [vmem:[%s62 + $0x18] sm:$0xf]
    %v70 = vld [vmem:[%s62 + $0x1c] sm:$0xf]
    %v71 = vld [vmem:[%s62 + $0x20] sm:$0xf]
    %v72 = vld [vmem:[%s62 + $0x24] sm:$0xf]
    %v73 = vld [vmem:[%s62 + $0x28] sm:$0xf]
    %v74 = vld [vmem:[%s62 + $0x2c] sm:$0xf]
    %v75 = vld [vmem:[%s62 + $0x30] sm:$0xf]
    %v76 = vld [vmem:[%s62 + $0x34] sm:$0xf]
    %v77 = vld [vmem:[%s62 + $0x38] sm:$0xf]
    %v78 = vld [vmem:[%s62 + $0x3c] sm:$0xf]
    %v79 = vld [vmem:[#allocation7] sm:$0xff]
    %v80 = vld [vmem:[#allocation7 + $0x8] sm:$0xff]
    %v81 = vld [vmem:[#allocation2] sm:$0xf]
    %v82 = vld [vmem:[#allocation2 + $0x4] sm:$0xf]
    %v85 = vunpack.c.l.b16 %v81
    %v86 = vunpack.c.l.b16 %v82
    %v87 = vpack.c.b16 %v86, %v85
    %v105 = vunpack.c.l.b16 %v63
    %v106 = vunpack.c.l.b16 %v64
    %v107 = vunpack.c.l.b16 %v65
    %v108 = vunpack.c.l.b16 %v66
    %v109 = vunpack.c.l.b16 %v67
    %v110 = vunpack.c.l.b16 %v68
    %v111 = vunpack.c.l.b16 %v69
    %v112 = vunpack.c.l.b16 %v70
    %v113 = vunpack.c.l.b16 %v71
    %v114 = vunpack.c.l.b16 %v72
    %v115 = vunpack.c.l.b16 %v73
    %v116 = vunpack.c.l.b16 %v74
    %v117 = vunpack.c.l.b16 %v75
    %v118 = vunpack.c.l.b16 %v76
    %v119 = vunpack.c.l.b16 %v77
    %v120 = vunpack.c.l.b16 %v78
    %v121 = vpack.c.b16 %v106, %v105
    %v122 = vpack.c.b16 %v108, %v107
    %v123 = vpack.c.b16 %v110, %v109
    %v124 = vpack.c.b16 %v112, %v111
    %v125 = vpack.c.b16 %v114, %v113
    %v126 = vpack.c.b16 %v116, %v115
    %v127 = vpack.c.b16 %v118, %v117
    %v128 = vpack.c.b16 %v120, %v119
    %137 = vmatprep.subr.bf16.mxu0 0
    %138 = vmatpush1.bf16.msra.mxu0 %v121
    %139 = vmatprep.subr.bf16.mxu0 0
    %140 = vmatpush1.bf16.msra.mxu0 %v122
    %141 = vmatprep.subr.bf16.mxu0 0
    %142 = vmatpush1.bf16.msra.mxu0 %v123
    %143 = vmatprep.subr.bf16.mxu0 0
    %144 = vmatpush1.bf16.msra.mxu0 %v124
    %145 = vmatprep.subr.bf16.mxu0 0
    %146 = vmatpush1.bf16.msra.mxu0 %v125
    %147 = vmatprep.subr.bf16.mxu0 0
    %148 = vmatpush1.bf16.msra.mxu0 %v126
    %149 = vmatprep.subr.bf16.mxu0 0
    %150 = vmatpush1.bf16.msra.mxu0 %v127
    %151 = vmatprep.subr.bf16.mxu0 0
    %152 = vmatpush1.bf16.msra.mxu0 %v128
    %153 = vmatprep.subr.bf16.mxu0 0
    %154 = vmatpush1.bf16.msra.mxu0 0
    %155 = vmatprep.subr.bf16.mxu0 0
    %156 = vmatpush1.bf16.msra.mxu0 0
    %157 = vmatprep.subr.bf16.mxu0 0
    %158 = vmatpush1.bf16.msra.mxu0 0
    %159 = vmatprep.subr.bf16.mxu0 0
    %160 = vmatpush1.bf16.msra.mxu0 0
    %161 = vmatprep.subr.bf16.mxu0 0
    %162 = vmatpush1.bf16.msra.mxu0 0
    %163 = vmatprep.subr.bf16.mxu0 0
    %164 = vmatpush1.bf16.msra.mxu0 0
    %165 = vmatprep.subr.bf16.mxu0 0
    %166 = vmatpush1.bf16.msra.mxu0 0
    %167 = vmatprep.subr.bf16.mxu0 0
    %168 = vmatpush1.bf16.msra.mxu0 0
    %169 = vmatprep.mubr.bf16.mxu0 0
    %170 = vmatmul.mubr.bf16.gmra.mrb[0].mxu0 %v87
    %v171 = vpop.f32.mrb[0].mxu0
    %v172 = vadd.f32 0.0, %v171
    %v173 = vpop.f32.mrb[0].mxu0
    %v174 = vpop.f32.mrb[0].mxu0
    %v175 = vadd.f32 0.0, %v174
    %v176 = vpop.f32.mrb[0].mxu0
    %177 = vdwg.mxu0
    %v178 = vadd.f32 %v79, %v172
    %v179 = vadd.f32 %v80, %v175
    %180 = vst [vmem:[#allocation7] sm:$0xff] %v178
    %181 = vst [vmem:[#allocation7 + $0x8] sm:$0xff] %v179
    // Predicated region
    $region26: #{tpu_custom_call.1} parent=1 // pred_check
      _
    $region27: #{tpu_custom_call.1} parent=1 // pred_check_branch
      %183 = sbr.rel (0) target = $region29
    $region28: #{tpu_custom_call.1} parent=1 // pred_region
      %s185 = ssub.s32 256, 256
      %186 = vsyncadd [#allocation4], %s185
      %s187 = sshll.u32 [#allocation7], 4
      %s188 = int_to_ptr.vmem [resolvable:$true] %s187
      %193 = dma.vmem_to_hbm [thread:$0]  %s188, 256, %s3, [#allocation4], 128, 128, 8
    $region29: #{tpu_custom_call.1} parent=1 // pred_fallthru
      _
    // Predicated region
    $region30: #{tpu_custom_call.1} parent=1 // pred_check
      _
    $region31: #{tpu_custom_call.1} parent=1 // pred_check_branch
      %195 = sbr.rel (0) target = $region33
    $region32: #{tpu_custom_call.1} parent=1 // pred_region
      %196 = dma.done [#allocation4], 256
    $region33: #{tpu_custom_call.1} parent=1 // pred_fallthru
      _
    %197 = vsyncpa [#allocation3], 1
    %198 = vsyncpa [#allocation6], 1
    %199 = vsyncpa [#allocation4], 1

</llo_original>
